<compile_context>
chip_gen: v6e
topology: v6e:2x2x1
jax: 0.10.0
libtpu: 0.0.40
codegen_flags: <defaults>
</compile_context>

<pallas_src>
import math

import jax
import jax.numpy as jnp
from jax.experimental import pallas as pl
from jax.experimental.pallas import tpu as pltpu


def _copy_kernel(x_ref, o_ref):
    # Identical in/out block shapes: plain full-tile, lane-dense copy.
    o_ref[...] = x_ref[...]


_LANE = 128
_TILE_BYTES = 2 * 1024 * 1024  # ~2 MiB/tile; in+out double-buffered ≈ 8 MiB VMEM


def reshape(x: jax.Array, shape) -> jax.Array:
    """Pallas equivalent of torch `x.view(shape)` (contiguous reshape)."""
    total = math.prod(x.shape)

    # Resolve a single -1 like torch.view.
    shape = tuple(shape)
    if -1 in shape:
        known = math.prod(d for d in shape if d != -1)
        shape = tuple(total // known if d == -1 else d for d in shape)
    assert math.prod(shape) == total, (x.shape, shape)

    # NOTE: for tiny tensors a plain `jnp.reshape(x, shape)` (no kernel) is
    # fastest; the kernel path is always taken here so it gets exercised.

    # Present the flat data as a lane-dense 2D slab. This reshape is
    # metadata-only for XLA; the kernel does the actual data movement with
    # unmasked 128-lane stores and contiguous DMAs.
    if total % _LANE == 0:
        rows, lanes = total // _LANE, _LANE
    else:
        rows, lanes = 1, total  # odd sizes: one full-extent block
    x2d = jnp.reshape(x, (rows, lanes))

    # Row-tile so each grid step moves ~2 MiB; tile rows are a multiple of 8
    # (sublane granularity). Partial last tiles are masked by Pallas.
    max_rows = max(8, (_TILE_BYTES // (lanes * x.dtype.itemsize)) // 8 * 8)
    th = rows if rows <= max_rows else max_rows
    grid = (pl.cdiv(rows, th),)

    out2d = pl.pallas_call(
        _copy_kernel,
        out_shape=jax.ShapeDtypeStruct((rows, lanes), x.dtype),
        grid_spec=pltpu.PrefetchScalarGridSpec(
            num_scalar_prefetch=0,
            grid=grid,
            in_specs=[pl.BlockSpec((th, lanes), lambda i: (i, 0))],
            out_specs=pl.BlockSpec((th, lanes), lambda i: (i, 0)),
        ),
        compiler_params=pltpu.CompilerParams(
            # Parallel axis lets v7x shard row-tiles across its 2 TensorCores.
            dimension_semantics=("parallel",),
            # Explicit scoped-VMEM limit: plenty for ~8 MiB of buffers, with
            # large headroom below v7x's 64 MiB physical VMEM.
            vmem_limit_bytes=32 * 1024 * 1024,
        ),
    )(x2d)

    # Target shape is metadata-only on the contiguous kernel output.
    return jnp.reshape(out2d, shape)


if __name__ == "__main__":
    key = jax.random.PRNGKey(0)
    N, C, H, W = 2, 4, 16, 16
    x = jax.random.normal(key, (N, C, H, W), dtype=jnp.float32)

    # Reshape(2, -1): flatten each batch element, as used in the VAE bottleneck.
    y = reshape(x, (N, -1))
    jax.block_until_ready(y)

    y_ref = jnp.reshape(x, (N, C * H * W))
    assert y.shape == (N, C * H * W), y.shape
    assert jnp.array_equal(y, y_ref), "Reshape kernel output mismatch"

    print("KERNEL_OK")
</pallas_src>

<mosaic_0001>
module attributes {stable_mosaic.version = 11 : i64} {
  func.func @_copy_kernel(%arg0: i32, %arg1: memref<16x128xf32, #tpu.memory_space<vmem>>, %arg2: memref<16x128xf32, #tpu.memory_space<vmem>>) attributes {dimension_semantics = [#tpu.dimension_semantics<parallel>], iteration_bounds = array<i64: 1>, scalar_prefetch = 0 : i64, scratch_operands = 0 : i64, tpu.core_type = #tpu.core_type<tc>, window_params = [{transform_indices = @transform_0, window_bounds = array<i64: 16, 128>}, {transform_indices = @transform_1, window_bounds = array<i64: 16, 128>}]} {
    %c0 = arith.constant 0 : index
    %c0_0 = arith.constant 0 : index
    %0 = vector.load %arg1[%c0, %c0_0] : memref<16x128xf32, #tpu.memory_space<vmem>>, vector<16x128xf32>
    %c0_1 = arith.constant 0 : index
    %c0_2 = arith.constant 0 : index
    %1 = vector.load %arg2[%c0_1, %c0_2] : memref<16x128xf32, #tpu.memory_space<vmem>>, vector<16x128xf32>
    tpu.vector_store %arg2[%c0_1, %c0_2], %0 {strides = array<i32>} : memref<16x128xf32, #tpu.memory_space<vmem>>, vector<16x128xf32>,
    return
  }
  func.func @transform_0(%arg0: i32) -> (i32, i32) {
    %c0_i32 = arith.constant 0 : i32
    %c0_i32_0 = arith.constant 0 : i32
    return %arg0, %c0_i32 : i32, i32
  }
  func.func @transform_1(%arg0: i32) -> (i32, i32) {
    %c0_i32 = arith.constant 0 : i32
    %c0_i32_0 = arith.constant 0 : i32
    return %arg0, %c0_i32 : i32, i32
  }
}

</mosaic_0001>

<llo_original>
// kernel: tpu_custom_call.1
$region0: #{tpu_custom_call.1}
  #allocation0 [shape = 'u32[]', space=smem, size = 0x4, offset = 0x4, fixed_abs, tag = 'smem constant byte address 0x4 - core index']
  #allocation1 [shape = 'u32[144,128]{1,0:T(1,128)}', space=vmem, size = 0x12000, scoped, tag = 'internal scratch']
  %s0 = inlined_call_operand.hbm [shape: f32[16,128], index: 0, kind: input, shape index: {}]
  %s1 = inlined_call_operand.hbm [shape: f32[16,128], index: 1, kind: output, shape index: {}]
  %s2 = sld [smem:[#allocation0]]
  $region18: #{tpu_custom_call.1} parent=0
    _
  %s4 = ssub.s32 1, %s2
  %s5 = scalar_select 0, %s4, %s2
  $region1: #{tpu_custom_call.1} parent=0
    #allocation2 [shape = 'u8[8192]{0}', space=vmem, size = 0x2000, scoped, tag = 'input window, operand 0, single buffered']
    #allocation3 [shape = 's32[1]{0}', space=sflag, size = 0x4, scoped, tag = 'scoped memory for tpu_custom_call.1']
    #allocation4 [shape = 's32[1]{0}', space=sflag, size = 0x4, scoped, tag = 'scoped memory for tpu_custom_call.1']
    #allocation5 [shape = 'u8[8192]{0}', space=vmem, size = 0x2000, scoped, tag = 'output window, operand 0, single buffered']
    %6 = vsyncpa [#allocation3], 0
    %7 = vsyncpa [#allocation4], 0
    // Predicated region
    $region2: #{tpu_custom_call.1} parent=1 // pred_check
      _
    $region3: #{tpu_custom_call.1} parent=1 // pred_check_branch
      %9 = sbr.rel (0) target = $region5
    $region4: #{tpu_custom_call.1} parent=1 // pred_region
      %s11 = ssub.s32 256, 256
      %12 = vsyncadd [#allocation3], %s11
      %s13 = sshll.u32 [#allocation2], 4
      %s14 = int_to_ptr.vmem [resolvable:$true] %s13
      %19 = dma.hbm_to_vmem [thread:$0]  %s0, 256, %s14, [#allocation3], 128, 128, 8
    $region5: #{tpu_custom_call.1} parent=1 // pred_fallthru
      _
    // Predicated region
    $region6: #{tpu_custom_call.1} parent=1 // pred_check
      _
    $region7: #{tpu_custom_call.1} parent=1 // pred_check_branch
      %21 = sbr.rel (0) target = $region9
    $region8: #{tpu_custom_call.1} parent=1 // pred_region
      %22 = dma.done [#allocation3], 256
    $region9: #{tpu_custom_call.1} parent=1 // pred_fallthru
      _
    %v23 = vld [vmem:[#allocation2] sm:$0xff]
    %v24 = vld [vmem:[#allocation2 + $0x8] sm:$0xff]
    %25 = vst [vmem:[#allocation5] sm:$0xff] %v23
    %26 = vst [vmem:[#allocation5 + $0x8] sm:$0xff] %v24
    // Predicated region
    $region10: #{tpu_custom_call.1} parent=1 // pred_check
      _
    $region11: #{tpu_custom_call.1} parent=1 // pred_check_branch
      %28 = sbr.rel (0) target = $region13
    $region12: #{tpu_custom_call.1} parent=1 // pred_region
      %s30 = ssub.s32 256, 256
      %31 = vsyncadd [#allocation4], %s30
      %s32 = sshll.u32 [#allocation5], 4
      %s33 = int_to_ptr.vmem [resolvable:$true] %s32
      %38 = dma.vmem_to_hbm [thread:$0]  %s33, 256, %s1, [#allocation4], 128, 128, 8
    $region13: #{tpu_custom_call.1} parent=1 // pred_fallthru
      _
    // Predicated region
    $region14: #{tpu_custom_call.1} parent=1 // pred_check
      _
    $region15: #{tpu_custom_call.1} parent=1 // pred_check_branch
      %40 = sbr.rel (0) target = $region17
    $region16: #{tpu_custom_call.1} parent=1 // pred_region
      %41 = dma.done [#allocation4], 256
    $region17: #{tpu_custom_call.1} parent=1 // pred_fallthru
      _
    %42 = vsyncpa [#allocation3], 1
    %43 = vsyncpa [#allocation4], 1

</llo_original>
